<compile_context>
chip_gen: v7x
topology: tpu7x:2x2x1
jax: 0.10.0
libtpu: 0.0.40
codegen_flags: <defaults>
</compile_context>

<pallas_src>
import jax
import jax.numpy as jnp
from jax import lax
from jax.experimental import pallas as pl
from jax.experimental.pallas import tpu as pltpu


def _default_vmem_limit():
    """Generation-aware VMEM limit: physical capacity minus ~24 MiB headroom."""
    try:
        info = pltpu.get_tpu_info()
        cap = getattr(info, "vmem_capacity_bytes", None)
        if cap:
            return int(max(cap - 24 * 1024 * 1024, cap // 2))
    except Exception:
        pass
    return 48 * 1024 * 1024  # safe on every generation


_VMEM_LIMIT = _default_vmem_limit()


def _pick_tile(dim, preferred):
    """Largest preferred tile that evenly divides `dim`; else the full dim."""
    for t in preferred:
        if t <= dim and dim % t == 0:
            return t
    return dim


# ----------------------------------------------------------------------------
# Head-major Q/K/V projection: grid = (B, S tiles, H); outputs are (B*H, S, Dh)
# so the attention kernel consumes them directly (no XLA transpose / slice).
# ----------------------------------------------------------------------------
def _proj_heads_kernel(x_ref, *refs):
    # refs = n weight refs (1, D, Dh) followed by n output refs (1, TS, Dh).
    n = len(refs) // 2
    x = x_ref[0]
    for i in range(n):
        w = refs[i][0]
        o_ref = refs[n + i]
        o_ref[0] = jnp.dot(x, w, preferred_element_type=jnp.float32).astype(o_ref.dtype)


def _project_heads(x, weights, heads):
    """x: (B, S, D) @ per-head weights [(H, D, Dh), ...] -> [(B*H, S, Dh), ...]."""
    B, S, D = x.shape
    H = heads
    Dh = weights[0].shape[-1]
    TS = _pick_tile(S, (512, 256, 128, 64, 32, 16, 8))
    # H innermost: the x block index is unchanged across heads, so Pallas does
    # not re-DMA the activation tile; only the small (D, Dh) weight block moves.
    grid = (B, S // TS, H)

    in_specs = [pl.BlockSpec((1, TS, D), lambda b, s, h: (b, s, 0))]
    for _ in weights:
        in_specs.append(pl.BlockSpec((1, D, Dh), lambda b, s, h: (h, 0, 0)))
    out_specs = [pl.BlockSpec((1, TS, Dh), lambda b, s, h: (b * H + h, s, 0))
                 for _ in weights]
    out_shape = [jax.ShapeDtypeStruct((B * H, S, Dh), x.dtype) for _ in weights]

    outs = pl.pallas_call(
        _proj_heads_kernel,
        grid=grid,
        in_specs=in_specs,
        out_specs=out_specs,
        out_shape=out_shape,
        compiler_params=pltpu.CompilerParams(
            dimension_semantics=("parallel", "parallel", "parallel"),
            vmem_limit_bytes=_VMEM_LIMIT,
        ),
    )(x, *weights)
    if isinstance(outs, (list, tuple)):
        return list(outs)
    return [outs]


# ----------------------------------------------------------------------------
# Output projection: grid = (B, S tiles, H) with H as the reduction axis; reads
# the head-major (B*H, S, Dh) attention output directly (head merge fused in).
# ----------------------------------------------------------------------------
def _out_proj_kernel(h_ref, w_ref, b_ref, o_ref, acc_ref):
    h_idx = pl.program_id(2)

    @pl.when(h_idx == 0)
    def _():
        acc_ref[...] = jnp.zeros(acc_ref.shape, jnp.float32)

    acc_ref[...] += jnp.dot(h_ref[0], w_ref[0], preferred_element_type=jnp.float32)

    @pl.when(h_idx == pl.num_programs(2) - 1)
    def _():
        # Bias added once after the head reduction finishes.
        o_ref[0] = (acc_ref[...] + b_ref[...]).astype(o_ref.dtype)


def _project_out(hidden, w_o_h, b_o, heads):
    """hidden: (B*H, S, Dh) -> (B, S, Dq); w_o_h: (H, Dh, Dq); b_o: (Dq,)."""
    BH, S, Dh = hidden.shape
    H = heads
    B = BH // H
    Dq = w_o_h.shape[-1]
    TS = _pick_tile(S, (512, 256, 128, 64, 32, 16, 8))
    grid = (B, S // TS, H)  # head axis last == reduction axis

    return pl.pallas_call(
        _out_proj_kernel,
        grid=grid,
        in_specs=[
            pl.BlockSpec((1, TS, Dh), lambda b, s, h: (b * H + h, s, 0)),
            pl.BlockSpec((1, Dh, Dq), lambda b, s, h: (h, 0, 0)),
            pl.BlockSpec((1, Dq), lambda b, s, h: (0, 0)),
        ],
        out_specs=pl.BlockSpec((1, TS, Dq), lambda b, s, h: (b, s, 0)),
        out_shape=jax.ShapeDtypeStruct((B, S, Dq), hidden.dtype),
        scratch_shapes=[pltpu.VMEM((TS, Dq), jnp.float32)],
        compiler_params=pltpu.CompilerParams(
            dimension_semantics=("parallel", "parallel", "arbitrary"),
            vmem_limit_bytes=_VMEM_LIMIT,
        ),
    )(hidden, w_o_h, b_o.reshape(1, Dq))


# ----------------------------------------------------------------------------
# Attention kernels.  The softmax scale is pre-folded into q (via the Q weight),
# so neither kernel multiplies by it.
# ----------------------------------------------------------------------------
def _attention_single_kv_kernel(q_ref, k_ref, v_ref, o_ref):
    """Single KV tile: one-pass softmax, no online-softmax state."""
    q = q_ref[0]
    k = k_ref[0]
    v = v_ref[0]
    s = lax.dot_general(q, k, (((1,), (1,)), ((), ())),
                        preferred_element_type=jnp.float32)      # (TQ, S_kv) f32
    m = jnp.max(s, axis=-1, keepdims=True)
    p = jnp.exp(s - m)
    l = jnp.sum(p, axis=-1, keepdims=True)
    o = lax.dot_general(p.astype(v.dtype), v, (((1,), (0,)), ((), ())),
                        preferred_element_type=jnp.float32)
    o_ref[0] = (o * pl.reciprocal(l, approx=True)).astype(o_ref.dtype)


def _flash_attention_kernel(q_ref, k_ref, v_ref, o_ref, m_ref, l_ref, acc_ref):
    kv_idx = pl.program_id(2)

    @pl.when(kv_idx == 0)
    def _():
        m_ref[...] = jnp.full(m_ref.shape, -jnp.inf, jnp.float32)
        l_ref[...] = jnp.zeros(l_ref.shape, jnp.float32)
        acc_ref[...] = jnp.zeros(acc_ref.shape, jnp.float32)

    q = q_ref[0]
    k = k_ref[0]
    v = v_ref[0]
    # TODO(synk): on v6e/v7x the exponentials could run in bf16 (bf16 EUP) /
    # exp2 for ~2x EUP throughput; kept f32 exp so the kernel is also correct
    # and fast-enough on v5e (no bf16 EUP/VALU).
    s = lax.dot_general(q, k, (((1,), (1,)), ((), ())),
                        preferred_element_type=jnp.float32)      # (TQ, TK) f32

    m_prev = m_ref[...]
    m_new = jnp.maximum(m_prev, jnp.max(s, axis=-1, keepdims=True))
    alpha = jnp.exp(m_prev - m_new)
    p = jnp.exp(s - m_new)

    l_ref[...] = alpha * l_ref[...] + jnp.sum(p, axis=-1, keepdims=True)
    acc_ref[...] = alpha * acc_ref[...] + lax.dot_general(
        p.astype(v.dtype), v, (((1,), (0,)), ((), ())),
        preferred_element_type=jnp.float32)
    m_ref[...] = m_new

    @pl.when(kv_idx == pl.num_programs(2) - 1)
    def _():
        inv_l = pl.reciprocal(l_ref[...], approx=True)  # EUP slot, ~free
        o_ref[0] = (acc_ref[...] * inv_l).astype(o_ref.dtype)


def pallas_flash_attention(q, k, v, *, tq=None, tk=None):
    """q: (BH, S, Dh), k/v: (BH, S_kv, Dh) -> (BH, S, Dh). Scale pre-folded in q."""
    BH, S, Dh = q.shape
    S_kv = k.shape[1]
    TQ = tq if tq is not None else _pick_tile(S, (512, 256, 128, 64, 32, 16, 8))
    TK = tk if tk is not None else _pick_tile(
        S_kv, (1024, 512, 256, 128, 64, 32, 16, 8))
    n_kv = S_kv // TK

    if n_kv == 1:
        # Common text-conditioned cross-attention case (S_kv small): skip the
        # online-softmax machinery entirely.
        return pl.pallas_call(
            _attention_single_kv_kernel,
            out_shape=jax.ShapeDtypeStruct((BH, S, Dh), q.dtype),
            grid=(BH, S // TQ),
            in_specs=[
                pl.BlockSpec((1, TQ, Dh), lambda b, qi: (b, qi, 0)),
                pl.BlockSpec((1, S_kv, Dh), lambda b, qi: (b, 0, 0)),
                pl.BlockSpec((1, S_kv, Dh), lambda b, qi: (b, 0, 0)),
            ],
            out_specs=pl.BlockSpec((1, TQ, Dh), lambda b, qi: (b, qi, 0)),
            compiler_params=pltpu.CompilerParams(
                dimension_semantics=("parallel", "parallel"),
                vmem_limit_bytes=_VMEM_LIMIT,
            ),
        )(q, k, v)

    return pl.pallas_call(
        _flash_attention_kernel,
        out_shape=jax.ShapeDtypeStruct((BH, S, Dh), q.dtype),
        grid=(BH, S // TQ, n_kv),
        in_specs=[
            pl.BlockSpec((1, TQ, Dh), lambda b, qi, ki: (b, qi, 0)),
            pl.BlockSpec((1, TK, Dh), lambda b, qi, ki: (b, ki, 0)),
            pl.BlockSpec((1, TK, Dh), lambda b, qi, ki: (b, ki, 0)),
        ],
        out_specs=pl.BlockSpec((1, TQ, Dh), lambda b, qi, ki: (b, qi, 0)),
        scratch_shapes=[
            pltpu.VMEM((TQ, 1), jnp.float32),   # running max m
            pltpu.VMEM((TQ, 1), jnp.float32),   # running sum l
            pltpu.VMEM((TQ, Dh), jnp.float32),  # output accumulator
        ],
        compiler_params=pltpu.CompilerParams(
            dimension_semantics=("parallel", "parallel", "arbitrary"),
            vmem_limit_bytes=_VMEM_LIMIT,
        ),
    )(q, k, v)


# ----------------------------------------------------------------------------
# CrossAttention module (parameters in plain JAX, hot-path compute in Pallas)
# ----------------------------------------------------------------------------
class CrossAttention:
    def __init__(self, query_dim, context_dim=None, heads=8, dim_head=64,
                 dropout=0.0, dtype=jnp.float32, key=None):
        inner_dim = dim_head * heads
        context_dim = context_dim if context_dim is not None else query_dim
        self.scale = dim_head ** (-0.5)
        self.heads = heads
        self.dim_head = dim_head
        self.query_dim = query_dim
        self.context_dim = context_dim
        self.inner_dim = inner_dim
        self.dtype = dtype
        # TODO(synk): dropout (train mode) not implemented; default p=0.0 makes
        # the Dropout in to_out an identity in this forward pass.

        if key is None:
            key = jax.random.PRNGKey(0)
        kq, kk, kv, ko, kb = jax.random.split(key, 5)

        def linear_init(k, fan_in, fan_out):
            # PyTorch default Linear init: U(-1/sqrt(fan_in), 1/sqrt(fan_in)).
            bound = 1.0 / (fan_in ** 0.5)
            return jax.random.uniform(k, (fan_in, fan_out), jnp.float32, -bound, bound)

        w_q = linear_init(kq, query_dim, inner_dim)
        w_k = linear_init(kk, context_dim, inner_dim)
        w_v = linear_init(kv, context_dim, inner_dim)
        w_o = linear_init(ko, inner_dim, query_dim)
        b_bound = 1.0 / (inner_dim ** 0.5)
        b_o = jax.random.uniform(kb, (query_dim,), jnp.float32, -b_bound, b_bound)

        # Reference-path copies (un-folded, (fan_in, fan_out) so y = x @ W).
        self.w_q = w_q.astype(dtype)
        self.w_k = w_k.astype(dtype)
        self.w_v = w_v.astype(dtype)
        self.w_o = w_o.astype(dtype)
        self.b_o = b_o.astype(dtype)

        # Kernel-path weights: head-major layout, softmax scale folded into the
        # Q weights (one-time host-side transform; zero runtime cost).
        def to_heads(w):  # (fan_in, H*Dh) -> (H, fan_in, Dh)
            return w.reshape(w.shape[0], heads, dim_head).transpose(1, 0, 2)

        self.wq_h = to_heads(w_q * self.scale).astype(dtype)   # (H, query_dim, Dh)
        self.wk_h = to_heads(w_k).astype(dtype)                 # (H, context_dim, Dh)
        self.wv_h = to_heads(w_v).astype(dtype)                 # (H, context_dim, Dh)
        self.wo_h = w_o.reshape(heads, dim_head, query_dim).astype(dtype)  # (H,Dh,Dq)

    # Helpers used only by the pure-JAX reference.
    def _heads_to_batch(self, t, B, S):
        H, Dh = self.heads, self.dim_head
        return t.reshape(B, S, H, Dh).transpose(0, 2, 1, 3).reshape(B * H, S, Dh)

    def _batch_to_heads(self, t, B, S):
        H, Dh = self.heads, self.dim_head
        return t.reshape(B, H, S, Dh).transpose(0, 2, 1, 3).reshape(B, S, H * Dh)

    def __call__(self, x, context=None, mask=None):
        # NOTE: `mask` is accepted but unused — faithful to the reference
        # PyTorch forward, whose _attention never applies it.
        # TODO(synk): additive attention mask variant not implemented.
        B, S, D = x.shape
        x = x.astype(self.dtype)

        if context is None:
            # Self-attention: fused QKV projection, head-major outputs, three
            # separate out_specs (no XLA slice of a concatenated tensor).
            q, k, v = _project_heads(x, [self.wq_h, self.wk_h, self.wv_h],
                                     self.heads)
        else:
            ctx = context.astype(self.dtype)
            (q,) = _project_heads(x, [self.wq_h], self.heads)
            k, v = _project_heads(ctx, [self.wk_h, self.wv_h], self.heads)

        hidden = pallas_flash_attention(q, k, v)          # (B*H, S, Dh)
        out = _project_out(hidden, self.wo_h, self.b_o, self.heads)  # (B, S, Dq)
        return out


# ----------------------------------------------------------------------------
# Pure-JAX reference for the correctness check
# ----------------------------------------------------------------------------
def reference_forward(mod, x, context=None):
    x = x.astype(mod.dtype)
    context = x if context is None else context.astype(mod.dtype)
    B, S, _ = x.shape
    S_ctx = context.shape[1]
    q = x @ mod.w_q
    k = context @ mod.w_k
    v = context @ mod.w_v
    q = mod._heads_to_batch(q, B, S)
    k = mod._heads_to_batch(k, B, S_ctx)
    v = mod._heads_to_batch(v, B, S_ctx)
    s = jnp.einsum("bid,bjd->bij", q.astype(jnp.float32),
                   k.astype(jnp.float32)) * mod.scale
    p = jax.nn.softmax(s, axis=-1)
    h = jnp.einsum("bij,bjd->bid", p, v.astype(jnp.float32)).astype(mod.dtype)
    h = mod._batch_to_heads(h, B, S)
    return (h @ mod.w_o + mod.b_o).astype(mod.dtype)


if __name__ == "__main__":
    key = jax.random.PRNGKey(0)
    k_param, k_x, k_ctx, k_q2, k_k2, k_v2 = jax.random.split(key, 6)

    # Small shapes consistent with the module's forward contract.
    batch, seq, query_dim = 2, 8, 32
    ctx_seq, context_dim = 16, 32
    heads, dim_head = 4, 8   # inner_dim = 32

    mod = CrossAttention(query_dim, context_dim=context_dim, heads=heads,
                         dim_head=dim_head, key=k_param)

    x = jax.random.normal(k_x, (batch, seq, query_dim), jnp.float32)
    context = jax.random.normal(k_ctx, (batch, ctx_seq, context_dim), jnp.float32)

    # Cross-attention path (separate Q projection + fused K/V projection).
    out_cross = jax.block_until_ready(mod(x, context))
    ref_cross = reference_forward(mod, x, context)
    assert out_cross.shape == (batch, seq, query_dim)
    assert jnp.allclose(out_cross, ref_cross, atol=2e-2, rtol=2e-2), \
        float(jnp.max(jnp.abs(out_cross - ref_cross)))

    # Self-attention path (fused QKV projection, head-major outputs).
    out_self = jax.block_until_ready(mod(x))
    ref_self = reference_forward(mod, x)
    assert out_self.shape == (batch, seq, query_dim)
    assert jnp.allclose(out_self, ref_self, atol=2e-2, rtol=2e-2), \
        float(jnp.max(jnp.abs(out_self - ref_self)))

    # Direct check of the multi-KV-tile flash kernel (forced small TK so the
    # online-softmax path compiles and matches a plain softmax reference).
    Bh, Sq, Skv, Dh = 4, 16, 32, 8
    q2 = jax.random.normal(k_q2, (Bh, Sq, Dh), jnp.float32)
    k2 = jax.random.normal(k_k2, (Bh, Skv, Dh), jnp.float32)
    v2 = jax.random.normal(k_v2, (Bh, Skv, Dh), jnp.float32)
    scale2 = Dh ** (-0.5)
    out_flash = jax.block_until_ready(
        pallas_flash_attention(q2 * scale2, k2, v2, tk=8))
    s2 = jnp.einsum("bid,bjd->bij", q2, k2) * scale2
    ref_flash = jnp.einsum("bij,bjd->bid", jax.nn.softmax(s2, axis=-1), v2)
    assert jnp.allclose(out_flash, ref_flash, atol=2e-2, rtol=2e-2), \
        float(jnp.max(jnp.abs(out_flash - ref_flash)))

    # bf16 path (native MXU dtype on v5e/v6e/v7x): smoke-check it runs and is finite.
    mod_bf16 = CrossAttention(query_dim, context_dim=context_dim, heads=heads,
                              dim_head=dim_head, dtype=jnp.bfloat16, key=k_param)
    out_bf16 = jax.block_until_ready(mod_bf16(x, context))
    assert out_bf16.shape == (batch, seq, query_dim)
    assert bool(jnp.all(jnp.isfinite(out_bf16.astype(jnp.float32))))

    print("KERNEL_OK")
</pallas_src>

<mosaic_0001>
module attributes {stable_mosaic.version = 11 : i64} {
  func.func @_proj_heads_kernel(%arg0: i32, %arg1: i32, %arg2: i32, %arg3: memref<1x8x32xf32, #tpu.memory_space<vmem>>, %arg4: memref<1x32x8xf32, #tpu.memory_space<vmem>>, %arg5: memref<1x8x8xf32, #tpu.memory_space<vmem>>) attributes {dimension_semantics = [#tpu.dimension_semantics<parallel>, #tpu.dimension_semantics<parallel>, #tpu.dimension_semantics<parallel>], iteration_bounds = array<i64: 2, 1, 4>, scalar_prefetch = 0 : i64, scratch_operands = 0 : i64, tpu.core_type = #tpu.core_type<tc>, window_params = [{transform_indices = @transform_0, window_bounds = array<i64: 1, 8, 32>}, {transform_indices = @transform_1, window_bounds = array<i64: 1, 32, 8>}, {transform_indices = @transform_2, window_bounds = array<i64: 1, 8, 8>}]} {
    %c0 = arith.constant 0 : index
    %c0_0 = arith.constant 0 : index
    %c0_1 = arith.constant 0 : index
    %0 = vector.load %arg3[%c0, %c0_0, %c0_1] : memref<1x8x32xf32, #tpu.memory_space<vmem>>, vector<1x8x32xf32>
    %1 = vector.shape_cast %0 : vector<1x8x32xf32> to vector<8x32xf32>
    %c0_2 = arith.constant 0 : index
    %c0_3 = arith.constant 0 : index
    %c0_4 = arith.constant 0 : index
    %2 = vector.load %arg4[%c0_2, %c0_3, %c0_4] : memref<1x32x8xf32, #tpu.memory_space<vmem>>, vector<1x32x8xf32>
    %3 = vector.shape_cast %2 : vector<1x32x8xf32> to vector<32x8xf32>
    %cst = arith.constant dense<0.000000e+00> : vector<8x8xf32>
    %4 = tpu.matmul %1, %3, %cst {dimension_numbers = #tpu.dot_dimension_numbers<[1], [0], [0], [1], [0, 0, 1, 1], [], []>} : vector<8x32xf32>, vector<32x8xf32>, vector<8x8xf32> -> vector<8x8xf32>
    %c0_5 = arith.constant 0 : index
    %c0_6 = arith.constant 0 : index
    %c0_7 = arith.constant 0 : index
    %5 = vector.load %arg5[%c0_5, %c0_6, %c0_7] : memref<1x8x8xf32, #tpu.memory_space<vmem>>, vector<1x8x8xf32>
    %6 = vector.shape_cast %5 : vector<1x8x8xf32> to vector<8x8xf32>
    %7 = vector.shape_cast %4 : vector<8x8xf32> to vector<1x8x8xf32>
    tpu.vector_store %arg5[%c0_5, %c0_6, %c0_7], %7 {strides = array<i32>} : memref<1x8x8xf32, #tpu.memory_space<vmem>>, vector<1x8x8xf32>,
    return
  }
  func.func @transform_0(%arg0: i32, %arg1: i32, %arg2: i32) -> (i32, i32, i32) {
    %c0_i32 = arith.constant 0 : i32
    %c0_i32_0 = arith.constant 0 : i32
    return %arg0, %arg1, %c0_i32 : i32, i32, i32
  }
  func.func @transform_1(%arg0: i32, %arg1: i32, %arg2: i32) -> (i32, i32, i32) {
    %c0_i32 = arith.constant 0 : i32
    %c0_i32_0 = arith.constant 0 : i32
    %c0_i32_1 = arith.constant 0 : i32
    return %arg2, %c0_i32, %c0_i32_0 : i32, i32, i32
  }
  func.func @transform_2(%arg0: i32, %arg1: i32, %arg2: i32) -> (i32, i32, i32) {
    %c4_i32 = arith.constant 4 : i32
    %0 = arith.muli %arg0, %c4_i32 : i32
    %1 = arith.addi %0, %arg2 : i32
    %c0_i32 = arith.constant 0 : i32
    %c0_i32_0 = arith.constant 0 : i32
    return %1, %arg1, %c0_i32 : i32, i32, i32
  }
}

</mosaic_0001>

<llo_original>
// kernel: tpu_custom_call.1
$region0: #{tpu_custom_call.1}
  #allocation0 [shape = 'u32[]', space=smem, size = 0x4, offset = 0x4, fixed_abs, tag = 'smem constant byte address 0x4 - core index']
  #allocation1 [shape = 'u32[144,128]{1,0:T(1,128)}', space=vmem, size = 0x12000, scoped, tag = 'internal scratch']
  %s0 = inlined_call_operand.vmem [shape: f32[2,8,32], index: 0, kind: input, shape index: {}]
  %s1 = inlined_call_operand.vmem [shape: f32[4,32,8], index: 1, kind: input, shape index: {}]
  %s2 = inlined_call_operand.hbm [shape: f32[8,8,8], index: 2, kind: output, shape index: {}]
  %s3 = sld [smem:[#allocation0]]
  $region41: #{tpu_custom_call.1} parent=0
    _
  %s5 = ssub.s32 1, %s3
  %s6 = scalar_select 0, %s5, %s3
  $region1: #{tpu_custom_call.1} parent=0
    #allocation2 [shape = 'u8[8192]{0}', space=vmem, size = 0x2000, scoped, tag = 'output window, operand 0']
    #allocation3 [shape = 's32[2]{0}', space=sflag, size = 0x8, scoped, tag = 'scoped memory for tpu_custom_call.1']
    %7 = vsyncpa [#allocation3], 0
    %s8 = scalar_lea.sflag [#allocation3], 1
    %9 = vsyncpa %s8, 0
    loop: start=0, step=1, limit=10
    $region2: #{tpu_custom_call.1} parent=1 // loop_pre_header
      _
    $region3: #{tpu_custom_call.1} parent=1 // loop_header
      %s11 = sphi 0, %s15
      %p12 = scmp.ge.s32.totalorder %s11, 10
      %s18 = sphi 0, %s37
      %s19 = sphi 0, %s33
      %s20 = sphi 0, %s29
      %s21 = sphi 0, %s18
      %s22 = sphi 0, %s19
      %s23 = sphi 0, %s20
      %s24 = sphi 0, %s21
      %s25 = sphi 0, %s22
      %s26 = sphi 0, %s23
      %s42 = sphi 0, %s44
      %s45 = sphi 0, %s42
      %s46 = sphi 0, %s45
      %s62 = sphi 0, %s46
      %s68 = sphi 0, %s70
      %s71 = sphi 0, %s68
      %s72 = sphi 0, %s71
      %s88 = sphi 0, %s72
      %s100 = sphi 0, %s102
      %s103 = sphi 0, %s100
      %s104 = sphi 0, %s103
      %s120 = sphi 0, %s104
    $region4: #{tpu_custom_call.1} parent=1 // loop_header_branch
      %14 = sbr.rel (%p12) target = $region8
    $region5: #{tpu_custom_call.1} parent=1 // loop_body
      %s16 = ssub.s32 %s11, 1
      %s17 = ssub.s32 %s11, 2
      %s27 = sadd.s32 1, %s20
      %p28 = scmp.ge.s32.totalorder %s27, 4
      %s29 = scalar_select %p28, 0, %s27
      %s30 = sadd.s32 1, %s19
      %s31 = scalar_select %p28, %s30, %s19
      %p32 = scmp.ge.s32.totalorder %s31, 1
      %s33 = scalar_select %p32, 0, %s31
      %s34 = sadd.s32 1, %s18
      %s35 = scalar_select %p32, %s34, %s18
      %p36 = scmp.ge.s32.totalorder %s35, 2
      %s37 = scalar_select %p36, 0, %s35
      %s38 = ssub.s32 %s18, %s37
      %s39 = ssub.s32 %s19, %s33
      %s40 = sor.u32 %s38, %s39
      %p41 = scmp.eq.s32.totalorder %s40, 0
      %s43 = sadd.s32 %s42, 1
      %s44 = scalar_select %p41, %s42, %s43
      %p47 = pneg %p41
      %p48 = scmp.eq.s32.totalorder %s11, 7
      %p49 = por %p47, %p48
      %p50 = scmp.ne.s32.totalorder %s42, %s45
      %p51 = scmp.eq.s32.totalorder %s11, 0
      %p52 = por %p50, %p51
      %p53 = scmp.ne.s32.totalorder %s42, %s45
      %p54 = scmp.eq.s32.totalorder %s16, 7
      %p55 = por %p53, %p54
      %p56 = scmp.ne.s32.totalorder %s45, %s46
      %p57 = scmp.eq.s32.totalorder %s16, 0
      %p58 = por %p56, %p57
      %p59 = scmp.ne.s32.totalorder %s45, %s46
      %p60 = scmp.eq.s32.totalorder %s17, 7
      %p61 = por %p59, %p60
      %p63 = scmp.ne.s32.totalorder %s46, %s62
      %p64 = scmp.eq.s32.totalorder %s17, 0
      %p65 = por %p63, %p64
      %s66 = ssub.s32 %s20, %s29
      %p67 = scmp.eq.s32.totalorder %s66, 0
      %s69 = sadd.s32 %s68, 1
      %s70 = scalar_select %p67, %s68, %s69
      %p73 = pneg %p67
      %p74 = scmp.eq.s32.totalorder %s11, 7
      %p75 = por %p73, %p74
      %p76 = scmp.ne.s32.totalorder %s68, %s71
      %p77 = scmp.eq.s32.totalorder %s11, 0
      %p78 = por %p76, %p77
      %p79 = scmp.ne.s32.totalorder %s68, %s71
      %p80 = scmp.eq.s32.totalorder %s16, 7
      %p81 = por %p79, %p80
      %p82 = scmp.ne.s32.totalorder %s71, %s72
      %p83 = scmp.eq.s32.totalorder %s16, 0
      %p84 = por %p82, %p83
      %p85 = scmp.ne.s32.totalorder %s71, %s72
      %p86 = scmp.eq.s32.totalorder %s17, 7
      %p87 = por %p85, %p86
      %p89 = scmp.ne.s32.totalorder %s72, %s88
      %p90 = scmp.eq.s32.totalorder %s17, 0
      %p91 = por %p89, %p90
      %s92 = smul.u32 %s18, 4
      %s93 = sadd.s32 %s92, %s20
      %s94 = smul.u32 %s37, 4
      %s95 = sadd.s32 %s94, %s29
      %s96 = ssub.s32 %s93, %s95
      %s97 = ssub.s32 %s19, %s33
      %s98 = sor.u32 %s96, %s97
      %p99 = scmp.eq.s32.totalorder %s98, 0
      %s101 = sadd.s32 %s100, 1
      %s102 = scalar_select %p99, %s100, %s101
      %p105 = pneg %p99
      %p106 = scmp.eq.s32.totalorder %s11, 7
      %p107 = por %p105, %p106
      %p108 = scmp.ne.s32.totalorder %s100, %s103
      %p109 = scmp.eq.s32.totalorder %s11, 0
      %p110 = por %p108, %p109
      %p111 = scmp.ne.s32.totalorder %s100, %s103
      %p112 = scmp.eq.s32.totalorder %s16, 7
      %p113 = por %p111, %p112
      %p114 = scmp.ne.s32.totalorder %s103, %s104
      %p115 = scmp.eq.s32.totalorder %s16, 0
      %p116 = por %p114, %p115
      %p117 = scmp.ne.s32.totalorder %s103, %s104
      %p118 = scmp.eq.s32.totalorder %s17, 7
      %p119 = por %p117, %p118
      %p121 = scmp.ne.s32.totalorder %s104, %s120
      %p122 = scmp.eq.s32.totalorder %s17, 0
      %p123 = por %p121, %p122
      %p124 = scmp.le.s32.totalorder 1, %s11
      %p125 = scmp.lt.s32.totalorder %s11, 9
      %p126 = pnand %p124, %p125
      %p127 = pneg %p126
      // Predicated region
      $region9: #{tpu_custom_call.1} parent=5 // pred_check
        _
      $region10: #{tpu_custom_call.1} parent=5 // pred_check_branch
        %129 = sbr.rel (%p126) target = $region12
      $region11: #{tpu_custom_call.1} parent=5 // pred_region
        %s130 = ssub.s32 %s11, 1
      $region12: #{tpu_custom_call.1} parent=5 // pred_fallthru
        _
      %p131 = scmp.lt.s32.totalorder %s11, 8
      // Predicated region
      $region13: #{tpu_custom_call.1} parent=5 // pred_check
        %p132 = pneg %p131
      $region14: #{tpu_custom_call.1} parent=5 // pred_check_branch
        %134 = sbr.rel (%p132) target = $region16
      $region15: #{tpu_custom_call.1} parent=5 // pred_region
        // Predicated region
        $region17: #{tpu_custom_call.1} parent=15 // pred_check
          %p135 = pneg %p52
        $region18: #{tpu_custom_call.1} parent=15 // pred_check_branch
          %137 = sbr.rel (%p135) target = $region20
        $region19: #{tpu_custom_call.1} parent=15 // pred_region
          %p138 = scmp.lt.s32.totalorder %s18, 1
          %s139 = scalar_select %p138, %s18, 1
          %p140 = scmp.lt.s32.totalorder %s19, 0
          %s141 = scalar_select %p140, %s19, 0
          %s142 = sadd.s32 %s141, %s139
          %s143 = smul.addr %s142, 8
          %s144 = scalar_lea.vmem %s0, %s143
        $region20: #{tpu_custom_call.1} parent=15 // pred_fallthru
          _
        // Predicated region
        $region21: #{tpu_custom_call.1} parent=15 // pred_check
          %p145 = pneg %p78
        $region22: #{tpu_custom_call.1} parent=15 // pred_check_branch
          %147 = sbr.rel (%p145) target = $region24
        $region23: #{tpu_custom_call.1} parent=15 // pred_region
          %p148 = scmp.lt.s32.totalorder %s20, 3
          %s149 = scalar_select %p148, %s20, 3
          %s150 = smul.addr %s149, 4
          %s151 = smul.addr %s150, 8
          %s152 = scalar_lea.vmem %s1, %s151
        $region24: #{tpu_custom_call.1} parent=15 // pred_fallthru
          _
      $region16: #{tpu_custom_call.1} parent=5 // pred_fallthru
        _
      %p153 = scmp.le.s32.totalorder 1, %s11
      %p154 = scmp.lt.s32.totalorder %s11, 9
      %p155 = pnand %p153, %p154
      %p156 = pneg %p155
      // Predicated region
      $region25: #{tpu_custom_call.1} parent=5 // pred_check
        _
      $region26: #{tpu_custom_call.1} parent=5 // pred_check_branch
        %158 = sbr.rel (%p155) target = $region28
      $region27: #{tpu_custom_call.1} parent=5 // pred_region
        %s159 = ssub.s32 %s11, 1
        %p160 = scmp.lt.s32.totalorder %s21, 1
        %s161 = scalar_select %p160, %s21, 1
        %p162 = scmp.lt.s32.totalorder %s22, 0
        %s163 = scalar_select %p162, %s22, 0
        %s164 = sadd.s32 %s163, %s161
        %s165 = smul.addr %s164, 8
        %s166 = scalar_lea.vmem %s0, %s165
        %p167 = pneg %p58
        %p168 = pneg %p55
        %p169 = scmp.lt.s32.totalorder %s23, 3
        %s170 = scalar_select %p169, %s23, 3
        %s171 = smul.addr %s170, 4
        %s172 = smul.addr %s171, 8
        %s173 = scalar_lea.vmem %s1, %s172
        %p174 = pneg %p84
        %p175 = pneg %p81
        %p176 = pneg %p116
        %p177 = pneg %p113
        %s178 = sand.u32 %s103, 1
        %s179 = scalar_lea.sflag [#allocation3], %s178
        %s180 = sand.u32 %s103, 1
        %s181 = smul.addr %s180, 8
        %s182 = scalar_lea.vmem [#allocation2], %s181
        %p183 = scmp.lt.s32.totalorder %s21, 1
        %s184 = scalar_select %p183, %s21, 1
        %p185 = scmp.lt.s32.totalorder %s22, 0
        %s186 = scalar_select %p185, %s22, 0
        %s187 = sadd.s32 %s186, %s184
        %s188 = smul.addr %s187, 8
        %s189 = scalar_lea.vmem %s0, %s188
        %p190 = scmp.lt.s32.totalorder %s23, 3
        %s191 = scalar_select %p190, %s23, 3
        %s192 = smul.addr %s191, 4
        %s193 = smul.addr %s192, 8
        %s194 = scalar_lea.vmem %s1, %s193
        %s195 = smul.u32 %s21, 4
        %s196 = sadd.s32 %s195, %s23
        %v197 = vld [vmem:[%s189] sm:$0xff]
        %v198 = vld [vmem:[%s194] sm:$0xff]
        %v199 = vld [vmem:[%s194 + $0x8] sm:$0xff]
        %v200 = vld [vmem:[%s194 + $0x10] sm:$0xff]
        %v201 = vld [vmem:[%s194 + $0x18] sm:$0xff]
        %vm202 = vcmask 261120
        %v204 = vsel %vm202, %v197, 0
        %206 = vmatprep.subr.mxu0 0.0
        %207 = vmatpush1.msra.mxu0 %v198
        %208 = vmatprep.subr.mxu0 0.0
        %209 = vmatpush1.msra.mxu0 %v199
        %210 = vmatprep.subr.mxu0 0.0
        %211 = vmatpush1.msra.mxu0 %v200
        %212 = vmatprep.subr.mxu0 0.0
        %213 = vmatpush1.msra.mxu0 %v201
        %214 = vmatprep.subr.mxu0 0.0
        %215 = vmatpush1.msra.mxu0 0.0
        %216 = vmatprep.subr.mxu0 0.0
        %217 = vmatpush1.msra.mxu0 0.0
        %218 = vmatprep.subr.mxu0 0.0
        %219 = vmatpush1.msra.mxu0 0.0
        %220 = vmatprep.subr.mxu0 0.0
        %221 = vmatpush1.msra.mxu0 0.0
        %222 = vmatprep.subr.mxu0 0.0
        %223 = vmatpush1.msra.mxu0 0.0
        %224 = vmatprep.subr.mxu0 0.0
        %225 = vmatpush1.msra.mxu0 0.0
        %226 = vmatprep.subr.mxu0 0.0
        %227 = vmatpush1.msra.mxu0 0.0
        %228 = vmatprep.subr.mxu0 0.0
        %229 = vmatpush1.msra.mxu0 0.0
        %230 = vmatprep.subr.mxu0 0.0
        %231 = vmatpush1.msra.mxu0 0.0
        %232 = vmatprep.subr.mxu0 0.0
        %233 = vmatpush1.msra.mxu0 0.0
        %234 = vmatprep.subr.mxu0 0.0
        %235 = vmatpush1.msra.mxu0 0.0
        %236 = vmatprep.subr.mxu0 0.0
        %237 = vmatpush1.msra.mxu0 0.0
        %238 = vmatprep.subr.mxu0 0.0
        %239 = vmatpush1.msra.mxu0 0.0
        %240 = vmatprep.subr.mxu0 0.0
        %241 = vmatpush1.msra.mxu0 0.0
        %242 = vmatprep.subr.mxu0 0.0
        %243 = vmatpush1.msra.mxu0 0.0
        %244 = vmatprep.subr.mxu0 0.0
        %245 = vmatpush1.msra.mxu0 0.0
        %246 = vmatprep.subr.mxu0 0.0
        %247 = vmatpush1.msra.mxu0 0.0
        %248 = vmatprep.subr.mxu0 0.0
        %249 = vmatpush1.msra.mxu0 0.0
        %250 = vmatprep.subr.mxu0 0.0
        %251 = vmatpush1.msra.mxu0 0.0
        %252 = vmatprep.subr.mxu0 0.0
        %253 = vmatpush1.msra.mxu0 0.0
        %254 = vmatprep.subr.mxu0 0.0
        %255 = vmatpush1.msra.mxu0 0.0
        %256 = vmatprep.subr.mxu0 0.0
        %257 = vmatpush1.msra.mxu0 0.0
        %258 = vmatprep.subr.mxu0 0.0
        %259 = vmatpush1.msra.mxu0 0.0
        %260 = vmatprep.subr.mxu0 0.0
        %261 = vmatpush1.msra.mxu0 0.0
        %262 = vmatprep.subr.mxu0 0.0
        %263 = vmatpush1.msra.mxu0 0.0
        %264 = vmatprep.subr.mxu0 0.0
        %265 = vmatpush1.msra.mxu0 0.0
        %266 = vmatprep.subr.mxu0 0.0
        %267 = vmatpush1.msra.mxu0 0.0
        %268 = vmatprep.subr.mxu0 0.0
        %269 = vmatpush1.msra.mxu0 0.0
        %270 = vmatprep.mubr.f32.mxu0 0.0
        %271 = vmatmul.mubr.f32.gmra.mrb[0].mxu0 %v204
        %v272 = vpop.f32.mrb[0].mxu0
        %v273 = vadd.f32 0.0, %v272
        %v274 = vpop.f32.mrb[0].mxu0
        %275 = vdwg.mxu0
        %vm276 = vcmask 64512
        %277 = vst.msk [vmem:[%s182] sm:$0xff] %vm276, %v273
        %s278 = sand.u32 %s103, 1
        %s279 = scalar_lea.sflag [#allocation3], %s278
        %s280 = sand.u32 %s103, 1
        %s281 = smul.addr %s280, 8
        %s282 = scalar_lea.vmem [#allocation2], %s281
        // Predicated region
        $region29: #{tpu_custom_call.1} parent=27 // pred_check
          %p283 = pneg %p113
        $region30: #{tpu_custom_call.1} parent=27 // pred_check_branch
          %285 = sbr.rel (%p283) target = $region32
        $region31: #{tpu_custom_call.1} parent=27 // pred_region
          %s286 = smul.u32 %s21, 4
          %s287 = sadd.s32 %s286, %s23
          %s289 = ssub.s32 128, 128
          %290 = vsyncadd %s279, %s289
          %s291 = sadd.s32 %s22, %s287
          %s292 = smul.addr %s291, 128
          %s293 = scalar_lea.hbm %s2, %s292
          %s295 = sshll.u32 %s282, 4
          %s296 = int_to_ptr.vmem [resolvable:$true] %s295
          %298 = dma.vmem_to_hbm [thread:$0]  %s296, 128, %s293, %s279
        $region32: #{tpu_custom_call.1} parent=27 // pred_fallthru
          _
      $region28: #{tpu_custom_call.1} parent=5 // pred_fallthru
        _
      %p299 = scmp.le.s32.totalorder 2, %s11
      // Predicated region
      $region33: #{tpu_custom_call.1} parent=5 // pred_check
        %p300 = pneg %p299
      $region34: #{tpu_custom_call.1} parent=5 // pred_check_branch
        %302 = sbr.rel (%p300) target = $region36
      $region35: #{tpu_custom_call.1} parent=5 // pred_region
        %s303 = ssub.s32 %s11, 2
        // Predicated region
        $region37: #{tpu_custom_call.1} parent=35 // pred_check
          %p304 = pneg %p119
        $region38: #{tpu_custom_call.1} parent=35 // pred_check_branch
          %306 = sbr.rel (%p304) target = $region40
        $region39: #{tpu_custom_call.1} parent=35 // pred_region
          %s307 = sand.u32 %s104, 1
          %s308 = scalar_lea.sflag [#allocation3], %s307
          %s309 = sand.u32 %s104, 1
          %s310 = smul.addr %s309, 8
          %s311 = scalar_lea.vmem [#allocation2], %s310
          %312 = dma.done %s308, 128
        $region40: #{tpu_custom_call.1} parent=35 // pred_fallthru
          _
      $region36: #{tpu_custom_call.1} parent=5 // pred_fallthru
        _
    $region6: #{tpu_custom_call.1} parent=1 // loop_footer
      %s15 = sadd.s32 1, %s11
    $region7: #{tpu_custom_call.1} parent=1 // loop_footer_branch
      %10 = sbr.rel target = $region3
    $region8: #{tpu_custom_call.1} parent=1 // loop_exit
      _
    %313 = vsyncpa [#allocation3], 1
    %s314 = scalar_lea.sflag [#allocation3], 1
    %315 = vsyncpa %s314, 1

</llo_original>
